<compile_context>
chip_gen: v7x
topology: tpu7x:2x2x1
jax: 0.10.0
libtpu: 0.0.40
codegen_flags: <defaults>
</compile_context>

<pallas_src>
import functools

import jax
import jax.numpy as jnp
from jax.experimental import pallas as pl
from jax.experimental.pallas import tpu as pltpu


def _lj_kernel(packed_ref, out_ref, *, sigma, epsilon):
    # out_ref is the resident (1, TN) node-energy accumulator for this node
    # tile; the edge grid axis (axis 1) is the reduction axis.
    @pl.when(pl.program_id(1) == 0)
    def _init():
        out_ref[...] = jnp.zeros_like(out_ref)

    r = pltpu.bitcast(packed_ref[0:1, :], jnp.float32)    # (1, TE) f32
    cut = pltpu.bitcast(packed_ref[1:2, :], jnp.float32)  # (1, TE) f32
    center = packed_ref[2:3, :]                           # (1, TE) i32

    # --- per-edge Lennard-Jones energy (pure VPU multiplies, no EUP work) ---
    s = sigma / r             # (sigma / r)
    s2 = s * s                # (sigma / r)^2
    s6 = s2 * s2 * s2         # (sigma / r)^6
    edge_eng = (2.0 * epsilon) * (s6 * s6 - s6) * cut     # (1, TE) f32

    # --- exact bf16 hi/lo split of the edge energies ---
    eng_hi = edge_eng.astype(jnp.bfloat16).astype(jnp.float32)
    eng_lo = edge_eng - eng_hi
    lhs = jnp.concatenate([eng_hi, eng_lo], axis=0).astype(jnp.bfloat16)  # (2, TE)

    # --- scatter-add to this node tile via a bf16 one-hot matmul on MXU ---
    tn = out_ref.shape[-1]
    te = r.shape[-1]
    node_base = pl.program_id(0) * tn
    node_ids = jax.lax.broadcasted_iota(jnp.int32, (tn, te), 0) + node_base
    onehot = (node_ids == center).astype(jnp.bfloat16)    # (TN, TE), exact 0/1

    # (2, TE) . (TN, TE)^T -> (2, TN); contraction over the edge axis,
    # f32 accumulation on the MXU.
    partial = jax.lax.dot_general(
        lhs, onehot,
        dimension_numbers=(((1,), (1,)), ((), ())),
        preferred_element_type=jnp.float32)

    out_ref[...] += partial[0:1, :] + partial[1:2, :]


def _vmem_budget_bytes(tn, te):
    """Scoped-VMEM request derived from the actual per-step tile footprint."""
    onehot = tn * te * 2           # bf16 one-hot temp
    iota = tn * te * 4             # int32 iota temp
    edge_in = 2 * 3 * te * 4       # double-buffered packed edge block
    out_blk = 2 * tn * 4           # double-buffered resident output block
    edge_tmp = 16 * te * 4         # assorted (1/2, TE) f32 temps
    need = 2 * (onehot + iota + edge_in + out_blk + edge_tmp)   # 2x headroom
    # Stay comfortably within v7x's 64 MiB physical VMEM per TensorCore.
    return int(min(40 * 1024 * 1024, max(16 * 1024 * 1024, need)))


def lj_forward(edge_index, edge_length, *, lj_sigma, lj_epsilon, num_nodes,
               edge_cutoff=None, per_atom_energy=None, lj_use_cutoff=False,
               edge_tile=2048, node_tile=512):
    """JAX wrapper mirroring SimpleLennardJones.forward (returns (N, 1))."""
    num_edges = int(edge_index.shape[1])
    te = int(edge_tile)
    tn = int(node_tile)
    assert te % 128 == 0, "edge_tile must be a multiple of 128 (lane width)"
    assert tn % 128 == 0, "node_tile must be a multiple of 128 (lane width)"

    e_pad = max(-(-num_edges // te), 1) * te
    n_pad_min = max(-(-num_nodes // 128), 1) * 128
    if tn >= n_pad_min:
        tn = n_pad_min
        n_pad = n_pad_min
    else:
        n_pad = -(-num_nodes // tn) * tn

    # --- layout plumbing: flatten, pad, lay edges lane-dense, pack into a
    #     single (3, E_pad) int32 stream (one DMA per edge tile) ---
    r = edge_length.reshape(-1).astype(jnp.float32)
    if lj_use_cutoff:
        cut = edge_cutoff.reshape(-1).astype(jnp.float32)
    else:
        cut = jnp.ones((num_edges,), jnp.float32)
    center = edge_index[0].reshape(-1).astype(jnp.int32)

    pad_e = e_pad - num_edges
    r = jnp.pad(r, (0, pad_e), constant_values=1.0)      # avoid div-by-zero
    cut = jnp.pad(cut, (0, pad_e), constant_values=0.0)  # pads contribute 0
    center = jnp.pad(center, (0, pad_e), constant_values=0)

    packed = jnp.stack(
        [jax.lax.bitcast_convert_type(r, jnp.int32),
         jax.lax.bitcast_convert_type(cut, jnp.int32),
         center], axis=0)                                 # (3, E_pad) i32

    kernel = functools.partial(_lj_kernel, sigma=float(lj_sigma),
                               epsilon=float(lj_epsilon))

    out = pl.pallas_call(
        kernel,
        grid=(n_pad // tn, e_pad // te),
        in_specs=[pl.BlockSpec((3, te), lambda n, e: (0, e))],   # pipelined edges
        out_specs=pl.BlockSpec((1, tn), lambda n, e: (0, n)),    # resident node tile
        out_shape=jax.ShapeDtypeStruct((1, n_pad), jnp.float32),
        compiler_params=pltpu.CompilerParams(
            # node tiles independent (v7x megacore), edge axis is a reduction
            dimension_semantics=("parallel", "arbitrary"),
            vmem_limit_bytes=_vmem_budget_bytes(tn, te)),
    )(packed)

    atomic = out[0, :num_nodes].reshape(num_nodes, 1)
    if per_atom_energy is not None:
        atomic = atomic + per_atom_energy.reshape(num_nodes, 1).astype(jnp.float32)
    return atomic


def _lj_reference(edge_index, edge_length, edge_cutoff, per_atom_energy,
                  lj_sigma, lj_epsilon, lj_use_cutoff, num_nodes):
    """Pure-JAX reference of the same math, for verification."""
    r = edge_length.reshape(-1, 1).astype(jnp.float32)
    lj = (lj_sigma / r) ** 6.0
    lj = jnp.square(lj) - lj
    lj = 2.0 * lj_epsilon * lj
    if lj_use_cutoff:
        lj = lj * edge_cutoff.reshape(-1, 1).astype(jnp.float32)
    atomic = jnp.zeros((num_nodes, 1), jnp.float32).at[edge_index[0]].add(lj)
    if per_atom_energy is not None:
        atomic = atomic + per_atom_energy.reshape(num_nodes, 1)
    return atomic


if __name__ == "__main__":
    key = jax.random.PRNGKey(0)
    k1, k2, k3, k4 = jax.random.split(key, 4)

    num_nodes = 200          # -> n_pad 256, 2 node tiles at node_tile=128
    num_edges = 300          # -> e_pad 384, 3 edge tiles at edge_tile=128
    lj_sigma = 1.0
    lj_epsilon = 0.25
    lj_use_cutoff = True

    edge_index = jax.random.randint(k1, (2, num_edges), 0, num_nodes,
                                    dtype=jnp.int32)
    edge_length = jax.random.uniform(k2, (num_edges,), jnp.float32, 0.9, 2.5)
    edge_cutoff = jax.random.uniform(k3, (num_edges, 1), jnp.float32, 0.0, 1.0)
    per_atom_energy = jax.random.normal(k4, (num_nodes, 1), jnp.float32)

    out = lj_forward(edge_index, edge_length,
                     lj_sigma=lj_sigma, lj_epsilon=lj_epsilon,
                     num_nodes=num_nodes,
                     edge_cutoff=edge_cutoff,
                     per_atom_energy=per_atom_energy,
                     lj_use_cutoff=lj_use_cutoff,
                     edge_tile=128,    # small tiles to exercise both grid axes
                     node_tile=128)
    out = jax.block_until_ready(out)

    ref = _lj_reference(edge_index, edge_length, edge_cutoff, per_atom_energy,
                        lj_sigma, lj_epsilon, lj_use_cutoff, num_nodes)

    assert out.shape == (num_nodes, 1)
    assert jnp.allclose(out, ref, rtol=1e-4, atol=1e-4), "mismatch vs reference"

    print("KERNEL_OK")
</pallas_src>

<mosaic_0001>
module attributes {stable_mosaic.version = 11 : i64} {
  func.func @_lj_kernel(%arg0: i32, %arg1: i32, %arg2: memref<3x128xi32, #tpu.memory_space<vmem>>, %arg3: memref<1x128xf32, #tpu.memory_space<vmem>>) attributes {dimension_semantics = [#tpu.dimension_semantics<parallel>, #tpu.dimension_semantics<arbitrary>], iteration_bounds = array<i64: 2, 3>, scalar_prefetch = 0 : i64, scratch_operands = 0 : i64, tpu.core_type = #tpu.core_type<tc>, window_params = [{transform_indices = @transform_0, window_bounds = array<i64: 3, 128>}, {transform_indices = @transform_1, window_bounds = array<i64: 1, 128>}]} {
    %c0_i32 = arith.constant 0 : i32
    %0 = arith.cmpi eq, %arg1, %c0_i32 : i32
    %1 = arith.extui %0 : i1 to i32
    %c0_i32_0 = arith.constant 0 : i32
    %2 = arith.cmpi ne, %1, %c0_i32_0 : i32
    scf.if %2 {
      %cst_10 = arith.constant 0.000000e+00 : f32
      %39 = vector.broadcast %cst_10 : f32 to vector<1x128xf32>
      %c0_11 = arith.constant 0 : index
      %c0_12 = arith.constant 0 : index
      %40 = vector.load %arg3[%c0_11, %c0_12] : memref<1x128xf32, #tpu.memory_space<vmem>>, vector<1x128xf32>
      tpu.vector_store %arg3[%c0_11, %c0_12], %39 {strides = array<i32>} : memref<1x128xf32, #tpu.memory_space<vmem>>, vector<1x128xf32>,
    } else {
    }
    %c0 = arith.constant 0 : index
    %c0_1 = arith.constant 0 : index
    %3 = vector.load %arg2[%c0, %c0_1] : memref<3x128xi32, #tpu.memory_space<vmem>>, vector<1x128xi32>
    %4 = tpu.bitcast %3 : vector<1x128xi32> -> vector<1x128xf32>
    %c1 = arith.constant 1 : index
    %c0_2 = arith.constant 0 : index
    %5 = vector.load %arg2[%c1, %c0_2] : memref<3x128xi32, #tpu.memory_space<vmem>>, vector<1x128xi32>
    %6 = tpu.bitcast %5 : vector<1x128xi32> -> vector<1x128xf32>
    %c2 = arith.constant 2 : index
    %c0_3 = arith.constant 0 : index
    %7 = vector.load %arg2[%c2, %c0_3] : memref<3x128xi32, #tpu.memory_space<vmem>>, vector<1x128xi32>
    %cst = arith.constant 1.000000e+00 : f32
    %8 = vector.broadcast %cst : f32 to vector<1x128xf32>
    %9 = arith.divf %8, %4 : vector<1x128xf32>
    %10 = arith.mulf %9, %9 : vector<1x128xf32>
    %11 = arith.mulf %10, %10 : vector<1x128xf32>
    %12 = arith.mulf %11, %10 : vector<1x128xf32>
    %13 = arith.mulf %12, %12 : vector<1x128xf32>
    %14 = arith.subf %13, %12 : vector<1x128xf32>
    %cst_4 = arith.constant 5.000000e-01 : f32
    %15 = vector.broadcast %cst_4 : f32 to vector<1x128xf32>
    %16 = arith.mulf %15, %14 : vector<1x128xf32>
    %17 = arith.mulf %16, %6 : vector<1x128xf32>
    %18 = arith.truncf %17 : vector<1x128xf32> to vector<1x128xbf16>
    %19 = arith.extf %18 : vector<1x128xbf16> to vector<1x128xf32>
    %20 = arith.subf %17, %19 : vector<1x128xf32>
    %21 = tpu.concatenate %19, %20 in 0 : vector<1x128xf32>, vector<1x128xf32> -> vector<2x128xf32>
    %22 = arith.truncf %21 : vector<2x128xf32> to vector<2x128xbf16>
    %c128_i32 = arith.constant 128 : i32
    %23 = arith.muli %arg0, %c128_i32 : i32
    %24 = tpu.iota {dimensions = array<i32: 0>} : vector<128x128xi32>
    %25 = vector.broadcast %23 : i32 to vector<128x128xi32>
    %26 = arith.addi %24, %25 : vector<128x128xi32>
    %27 = vector.broadcast %7 : vector<1x128xi32> to vector<128x128xi32>
    %28 = arith.cmpi eq, %26, %27 : vector<128x128xi32>
    %29 = arith.extui %28 : vector<128x128xi1> to vector<128x128xi32>
    %30 = arith.sitofp %29 : vector<128x128xi32> to vector<128x128xf32>
    %31 = arith.truncf %30 : vector<128x128xf32> to vector<128x128xbf16>
    %cst_5 = arith.constant dense<0.000000e+00> : vector<2x128xf32>
    %32 = tpu.matmul %22, %31, %cst_5 {dimension_numbers = #tpu.dot_dimension_numbers<[1], [1], [0], [0], [0, 0, 1, 0], [], []>} : vector<2x128xbf16>, vector<128x128xbf16>, vector<2x128xf32> -> vector<2x128xf32>
    %c0_6 = arith.constant 0 : index
    %c0_7 = arith.constant 0 : index
    %33 = vector.load %arg3[%c0_6, %c0_7] : memref<1x128xf32, #tpu.memory_space<vmem>>, vector<1x128xf32>
    %34 = vector.extract_strided_slice %32 {offsets = [0, 0], sizes = [1, 128], strides = [1, 1]} : vector<2x128xf32> to vector<1x128xf32>
    %35 = vector.extract_strided_slice %32 {offsets = [1, 0], sizes = [1, 128], strides = [1, 1]} : vector<2x128xf32> to vector<1x128xf32>
    %36 = arith.addf %34, %35 : vector<1x128xf32>
    %37 = arith.addf %33, %36 : vector<1x128xf32>
    %c0_8 = arith.constant 0 : index
    %c0_9 = arith.constant 0 : index
    %38 = vector.load %arg3[%c0_8, %c0_9] : memref<1x128xf32, #tpu.memory_space<vmem>>, vector<1x128xf32>
    tpu.vector_store %arg3[%c0_8, %c0_9], %37 {strides = array<i32>} : memref<1x128xf32, #tpu.memory_space<vmem>>, vector<1x128xf32>,
    return
  }
  func.func @transform_0(%arg0: i32, %arg1: i32) -> (i32, i32) {
    %c0_i32 = arith.constant 0 : i32
    %c0_i32_0 = arith.constant 0 : i32
    return %c0_i32, %arg1 : i32, i32
  }
  func.func @transform_1(%arg0: i32, %arg1: i32) -> (i32, i32) {
    %c0_i32 = arith.constant 0 : i32
    %c0_i32_0 = arith.constant 0 : i32
    return %c0_i32, %arg0 : i32, i32
  }
}

</mosaic_0001>

<llo_original>
// kernel: tpu_custom_call.1
$region0: #{tpu_custom_call.1}
  #allocation0 [shape = 'u32[]', space=smem, size = 0x4, offset = 0x4, fixed_abs, tag = 'smem constant byte address 0x4 - core index']
  #allocation1 [shape = 'u32[144,128]{1,0:T(1,128)}', space=vmem, size = 0x12000, scoped, tag = 'internal scratch']
  %s0 = inlined_call_operand.hbm [shape: s32[3,384], index: 0, kind: input, shape index: {}]
  %s1 = inlined_call_operand.hbm [shape: f32[1,256], index: 1, kind: output, shape index: {}]
  %s2 = sld [smem:[#allocation0]]
  $region45: #{tpu_custom_call.1} parent=0
    _
  %s4 = ssub.s32 1, %s2
  %s5 = scalar_select 0, %s4, %s2
  $region1: #{tpu_custom_call.1} parent=0
    #allocation2 [shape = 'u8[4096]{0}', space=vmem, size = 0x1000, scoped, tag = 'input window, operand 0']
    #allocation3 [shape = 's32[2]{0}', space=sflag, size = 0x8, scoped, tag = 'scoped memory for tpu_custom_call.1']
    #allocation4 [shape = 's32[2]{0}', space=sflag, size = 0x8, scoped, tag = 'scoped memory for tpu_custom_call.1']
    #allocation5 [shape = 'u8[1024]{0}', space=vmem, size = 0x400, scoped, tag = 'output window, operand 0']
    %6 = vsyncpa [#allocation3], 0
    %s7 = scalar_lea.sflag [#allocation3], 1
    %8 = vsyncpa %s7, 0
    %9 = vsyncpa [#allocation4], 0
    %s10 = scalar_lea.sflag [#allocation4], 1
    %11 = vsyncpa %s10, 0
    loop: start=0, step=1, limit=8
    $region2: #{tpu_custom_call.1} parent=1 // loop_pre_header
      _
    $region3: #{tpu_custom_call.1} parent=1 // loop_header
      %s13 = sphi 0, %s17
      %p14 = scmp.ge.s32.totalorder %s13, 8
      %s20 = sphi 0, %s32
      %s21 = sphi 0, %s28
      %s22 = sphi 0, %s20
      %s23 = sphi 0, %s21
      %s24 = sphi 0, %s22
      %s25 = sphi 0, %s23
      %s35 = sphi 0, %s37
      %s38 = sphi 0, %s35
      %s39 = sphi 0, %s38
      %s55 = sphi 0, %s39
      %s61 = sphi 0, %s63
      %s64 = sphi 0, %s61
      %s65 = sphi 0, %s64
      %s81 = sphi 0, %s65
    $region4: #{tpu_custom_call.1} parent=1 // loop_header_branch
      %16 = sbr.rel (%p14) target = $region8
    $region5: #{tpu_custom_call.1} parent=1 // loop_body
      %s18 = ssub.s32 %s13, 1
      %s19 = ssub.s32 %s13, 2
      %s26 = sadd.s32 1, %s21
      %p27 = scmp.ge.s32.totalorder %s26, 3
      %s28 = scalar_select %p27, 0, %s26
      %s29 = sadd.s32 1, %s20
      %s30 = scalar_select %p27, %s29, %s20
      %p31 = scmp.ge.s32.totalorder %s30, 2
      %s32 = scalar_select %p31, 0, %s30
      %s33 = ssub.s32 %s21, %s28
      %p34 = scmp.eq.s32.totalorder %s33, 0
      %s36 = sadd.s32 %s35, 1
      %s37 = scalar_select %p34, %s35, %s36
      %p40 = pneg %p34
      %p41 = scmp.eq.s32.totalorder %s13, 5
      %p42 = por %p40, %p41
      %p43 = scmp.ne.s32.totalorder %s35, %s38
      %p44 = scmp.eq.s32.totalorder %s13, 0
      %p45 = por %p43, %p44
      %p46 = scmp.ne.s32.totalorder %s35, %s38
      %p47 = scmp.eq.s32.totalorder %s18, 5
      %p48 = por %p46, %p47
      %p49 = scmp.ne.s32.totalorder %s38, %s39
      %p50 = scmp.eq.s32.totalorder %s18, 0
      %p51 = por %p49, %p50
      %p52 = scmp.ne.s32.totalorder %s38, %s39
      %p53 = scmp.eq.s32.totalorder %s19, 5
      %p54 = por %p52, %p53
      %p56 = scmp.ne.s32.totalorder %s39, %s55
      %p57 = scmp.eq.s32.totalorder %s19, 0
      %p58 = por %p56, %p57
      %s59 = ssub.s32 %s20, %s32
      %p60 = scmp.eq.s32.totalorder %s59, 0
      %s62 = sadd.s32 %s61, 1
      %s63 = scalar_select %p60, %s61, %s62
      %p66 = pneg %p60
      %p67 = scmp.eq.s32.totalorder %s13, 5
      %p68 = por %p66, %p67
      %p69 = scmp.ne.s32.totalorder %s61, %s64
      %p70 = scmp.eq.s32.totalorder %s13, 0
      %p71 = por %p69, %p70
      %p72 = scmp.ne.s32.totalorder %s61, %s64
      %p73 = scmp.eq.s32.totalorder %s18, 5
      %p74 = por %p72, %p73
      %p75 = scmp.ne.s32.totalorder %s64, %s65
      %p76 = scmp.eq.s32.totalorder %s18, 0
      %p77 = por %p75, %p76
      %p78 = scmp.ne.s32.totalorder %s64, %s65
      %p79 = scmp.eq.s32.totalorder %s19, 5
      %p80 = por %p78, %p79
      %p82 = scmp.ne.s32.totalorder %s65, %s81
      %p83 = scmp.eq.s32.totalorder %s19, 0
      %p84 = por %p82, %p83
      %p85 = scmp.le.s32.totalorder 1, %s13
      %p86 = scmp.lt.s32.totalorder %s13, 7
      %p87 = pnand %p85, %p86
      %p88 = pneg %p87
      // Predicated region
      $region9: #{tpu_custom_call.1} parent=5 // pred_check
        _
      $region10: #{tpu_custom_call.1} parent=5 // pred_check_branch
        %90 = sbr.rel (%p87) target = $region12
      $region11: #{tpu_custom_call.1} parent=5 // pred_region
        %s91 = ssub.s32 %s13, 1
      $region12: #{tpu_custom_call.1} parent=5 // pred_fallthru
        _
      %p92 = scmp.lt.s32.totalorder %s13, 6
      // Predicated region
      $region13: #{tpu_custom_call.1} parent=5 // pred_check
        %p93 = pneg %p92
      $region14: #{tpu_custom_call.1} parent=5 // pred_check_branch
        %95 = sbr.rel (%p93) target = $region16
      $region15: #{tpu_custom_call.1} parent=5 // pred_region
        // Predicated region
        $region17: #{tpu_custom_call.1} parent=15 // pred_check
          %p96 = pneg %p45
        $region18: #{tpu_custom_call.1} parent=15 // pred_check_branch
          %98 = sbr.rel (%p96) target = $region20
        $region19: #{tpu_custom_call.1} parent=15 // pred_region
          %s99 = sand.u32 %s35, 1
          %s100 = scalar_lea.sflag [#allocation3], %s99
          %s101 = sand.u32 %s35, 1
          %s102 = smul.addr %s101, 4
          %s103 = scalar_lea.vmem [#allocation2], %s102
          %s105 = ssub.s32 64, 64
          %106 = vsyncadd %s100, %s105
          %s107 = smul.addr %s21, 64
          %s108 = scalar_lea.hbm %s0, %s107
          %s110 = sshll.u32 %s103, 4
          %s111 = int_to_ptr.vmem [resolvable:$true] %s110
          %113 = dma.hbm_to_vmem [thread:$0]  %s108, 64, %s111, %s100
        $region20: #{tpu_custom_call.1} parent=15 // pred_fallthru
          _
      $region16: #{tpu_custom_call.1} parent=5 // pred_fallthru
        _
      %p114 = scmp.le.s32.totalorder 1, %s13
      %p115 = scmp.lt.s32.totalorder %s13, 7
      %p116 = pnand %p114, %p115
      %p117 = pneg %p116
      // Predicated region
      $region21: #{tpu_custom_call.1} parent=5 // pred_check
        _
      $region22: #{tpu_custom_call.1} parent=5 // pred_check_branch
        %119 = sbr.rel (%p116) target = $region24
      $region23: #{tpu_custom_call.1} parent=5 // pred_region
        %s120 = ssub.s32 %s13, 1
        %s121 = sand.u32 %s38, 1
        %s122 = scalar_lea.sflag [#allocation3], %s121
        %s123 = sand.u32 %s38, 1
        %s124 = smul.addr %s123, 4
        %s125 = scalar_lea.vmem [#allocation2], %s124
        // Predicated region
        $region25: #{tpu_custom_call.1} parent=23 // pred_check
          %p126 = pneg %p51
        $region26: #{tpu_custom_call.1} parent=23 // pred_check_branch
          %128 = sbr.rel (%p126) target = $region28
        $region27: #{tpu_custom_call.1} parent=23 // pred_region
          %129 = dma.done %s122, 64
        $region28: #{tpu_custom_call.1} parent=23 // pred_fallthru
          _
        %s130 = sand.u32 %s38, 1
        %s131 = scalar_lea.sflag [#allocation3], %s130
        %s132 = sand.u32 %s38, 1
        %s133 = smul.addr %s132, 4
        %s134 = scalar_lea.vmem [#allocation2], %s133
        %p135 = pneg %p51
        %p136 = pneg %p48
        %p137 = pneg %p77
        %p138 = pneg %p74
        %s139 = sand.u32 %s64, 1
        %s140 = scalar_lea.sflag [#allocation4], %s139
        %s141 = sand.u32 %s64, 1
        %s142 = scalar_lea.vmem [#allocation5], %s141
        %p144 = scmp.eq.s32.totalorder %s23, 0
        // Predicated region
        $region29: #{tpu_custom_call.1} parent=23 // pred_check
          %p145 = pneg %p144
        $region30: #{tpu_custom_call.1} parent=23 // pred_check_branch
          %147 = sbr.rel (%p145) target = $region32
        $region31: #{tpu_custom_call.1} parent=23 // pred_region
          %148 = vst [vmem:[%s142] sm:$0x1] 0.0
        $region32: #{tpu_custom_call.1} parent=23 // pred_fallthru
          _
        %v149 = vld [vmem:[%s125] sm:$0x1]
        %v151 = vld [vmem:[%s125 + $0x1] sm:$0x1]
        %v153 = vld [vmem:[%s125 + $0x2] sm:$0x1]
        %v154 = vrcp.pop %v149
        %v155 = vmul.f32 1.0, %v154
        %v156 = vmul.f32 %v155, %v155
        %v157 = vmul.f32 %v156, %v156
        %v158 = vmul.f32 %v157, %v156
        %v159 = vmul.f32 %v158, %v158
        %v160 = vsub.f32 %v159, %v158
        %v161 = vmul.f32 %v160, 0.5
        %v162 = vmul.f32 %v161, %v151
        %v163 = vpack.c.bf16 %v162, %v162
        %v164 = vunpack.c.l.bf16 %v163
        %v165 = vsub.f32 %v162, %v164
        %v167 = vrot.slane %v165, 7
        %vm169 = vcmask 1040384
        %v170 = vsel %vm169, %v164, %v167
        %v171 = vpack.c.bf16 %v170, %v170
        %s172 = smul.u32 %s22, 128
        %v173 = vlaneseq
        %v174 = vshrl.u32 %v173, 7
        %v175 = vadd.s32 %v174, 8
        %v176 = vadd.s32 %v174, 16
        %v177 = vadd.s32 %v174, 24
        %v178 = vadd.s32 %v174, 32
        %v179 = vadd.s32 %v174, 40
        %v180 = vadd.s32 %v174, 48
        %v181 = vadd.s32 %v174, 56
        %v182 = vadd.s32 %v174, 64
        %v183 = vadd.s32 %v174, 72
        %v184 = vadd.s32 %v174, 80
        %v185 = vadd.s32 %v174, 88
        %v186 = vadd.s32 %v174, 96
        %v187 = vadd.s32 %v174, 104
        %v188 = vadd.s32 %v174, 112
        %v189 = vadd.s32 %v174, 120
        %v190 = vstv %s172
        %v191 = vadd.s32 %v174, %v190
        %v192 = vadd.s32 %v175, %v190
        %v193 = vadd.s32 %v176, %v190
        %v194 = vadd.s32 %v177, %v190
        %v195 = vadd.s32 %v178, %v190
        %v196 = vadd.s32 %v179, %v190
        %v197 = vadd.s32 %v180, %v190
        %v198 = vadd.s32 %v181, %v190
        %v199 = vadd.s32 %v182, %v190
        %v200 = vadd.s32 %v183, %v190
        %v201 = vadd.s32 %v184, %v190
        %v202 = vadd.s32 %v185, %v190
        %v203 = vadd.s32 %v186, %v190
        %v204 = vadd.s32 %v187, %v190
        %v205 = vadd.s32 %v188, %v190
        %v206 = vadd.s32 %v189, %v190
        %v207 = vlaneseq
        %v208 = vshrl.u32 %v207, 7
        %v209 = vsub.s32 0, %v208
        %v210 = vrot.slane %v153, %v209
        %vm211 = vcmp.eq.s32.totalorder %v191, %v210
        %vm212 = vcmp.eq.s32.totalorder %v192, %v210
        %vm213 = vcmp.eq.s32.totalorder %v193, %v210
        %vm214 = vcmp.eq.s32.totalorder %v194, %v210
        %vm215 = vcmp.eq.s32.totalorder %v195, %v210
        %vm216 = vcmp.eq.s32.totalorder %v196, %v210
        %vm217 = vcmp.eq.s32.totalorder %v197, %v210
        %vm218 = vcmp.eq.s32.totalorder %v198, %v210
        %vm219 = vcmp.eq.s32.totalorder %v199, %v210
        %vm220 = vcmp.eq.s32.totalorder %v200, %v210
        %vm221 = vcmp.eq.s32.totalorder %v201, %v210
        %vm222 = vcmp.eq.s32.totalorder %v202, %v210
        %vm223 = vcmp.eq.s32.totalorder %v203, %v210
        %vm224 = vcmp.eq.s32.totalorder %v204, %v210
        %vm225 = vcmp.eq.s32.totalorder %v205, %v210
        %vm226 = vcmp.eq.s32.totalorder %v206, %v210
        %v227 = vsel %vm211, 1, 0
        %v228 = vsel %vm212, 1, 0
        %v229 = vsel %vm213, 1, 0
        %v230 = vsel %vm214, 1, 0
        %v231 = vsel %vm215, 1, 0
        %v232 = vsel %vm216, 1, 0
        %v233 = vsel %vm217, 1, 0
        %v234 = vsel %vm218, 1, 0
        %v235 = vsel %vm219, 1, 0
        %v236 = vsel %vm220, 1, 0
        %v237 = vsel %vm221, 1, 0
        %v238 = vsel %vm222, 1, 0
        %v239 = vsel %vm223, 1, 0
        %v240 = vsel %vm224, 1, 0
        %v241 = vsel %vm225, 1, 0
        %v242 = vsel %vm226, 1, 0
        %v243 = vcvt.s32.f32 %v227
        %v244 = vcvt.s32.f32 %v228
        %v245 = vcvt.s32.f32 %v229
        %v246 = vcvt.s32.f32 %v230
        %v247 = vcvt.s32.f32 %v231
        %v248 = vcvt.s32.f32 %v232
        %v249 = vcvt.s32.f32 %v233
        %v250 = vcvt.s32.f32 %v234
        %v251 = vcvt.s32.f32 %v235
        %v252 = vcvt.s32.f32 %v236
        %v253 = vcvt.s32.f32 %v237
        %v254 = vcvt.s32.f32 %v238
        %v255 = vcvt.s32.f32 %v239
        %v256 = vcvt.s32.f32 %v240
        %v257 = vcvt.s32.f32 %v241
        %v258 = vcvt.s32.f32 %v242
        %v259 = vpack.c.bf16 %v244, %v243
        %v260 = vpack.c.bf16 %v246, %v245
        %v261 = vpack.c.bf16 %v248, %v247
        %v262 = vpack.c.bf16 %v250, %v249
        %v263 = vpack.c.bf16 %v252, %v251
        %v264 = vpack.c.bf16 %v254, %v253
        %v265 = vpack.c.bf16 %v256, %v255
        %v266 = vpack.c.bf16 %v258, %v257
        %267 = vmatprep.subr.bf16.mxu0 0
        %268 = vmatpush1.bf16.xpose.msra.mxu0 %v259
        %269 = vmatprep.subr.bf16.mxu0 0
        %270 = vmatpush1.bf16.xpose.msra.mxu0 %v260
        %271 = vmatprep.subr.bf16.mxu0 0
        %272 = vmatpush1.bf16.xpose.msra.mxu0 %v261
        %273 = vmatprep.subr.bf16.mxu0 0
        %274 = vmatpush1.bf16.xpose.msra.mxu0 %v262
        %275 = vmatprep.subr.bf16.mxu0 0
        %276 = vmatpush1.bf16.xpose.msra.mxu0 %v263
        %277 = vmatprep.subr.bf16.mxu0 0
        %278 = vmatpush1.bf16.xpose.msra.mxu0 %v264
        %279 = vmatprep.subr.bf16.mxu0 0
        %280 = vmatpush1.bf16.xpose.msra.mxu0 %v265
        %281 = vmatprep.subr.bf16.mxu0 0
        %282 = vmatpush1.bf16.xpose.msra.mxu0 %v266
        %283 = vmatprep.subr.bf16.mxu0 0
        %284 = vmatpush1.bf16.xpose.msra.mxu0 0
        %285 = vmatprep.subr.bf16.mxu0 0
        %286 = vmatpush1.bf16.xpose.msra.mxu0 0
        %287 = vmatprep.subr.bf16.mxu0 0
        %288 = vmatpush1.bf16.xpose.msra.mxu0 0
        %289 = vmatprep.subr.bf16.mxu0 0
        %290 = vmatpush1.bf16.xpose.msra.mxu0 0
        %291 = vmatprep.subr.bf16.mxu0 0
        %292 = vmatpush1.bf16.xpose.msra.mxu0 0
        %293 = vmatprep.subr.bf16.mxu0 0
        %294 = vmatpush1.bf16.xpose.msra.mxu0 0
        %295 = vmatprep.subr.bf16.mxu0 0
        %296 = vmatpush1.bf16.xpose.msra.mxu0 0
        %297 = vmatprep.subr.bf16.mxu0 0
        %298 = vmatpush1.bf16.xpose.msra.mxu0 0
        %299 = vmatprep.mubr.bf16.mxu0 0
        %300 = vmatmul.mubr.bf16.gmra.mrb[0].mxu0 %v171
        %v301 = vpop.f32.mrb[0].mxu0
        %v302 = vadd.f32 0.0, %v301
        %v303 = vpop.f32.mrb[0].mxu0
        %v304 = vpop.f32.mrb[0].mxu0
        %v305 = vpop.f32.mrb[0].mxu0
        %306 = vdwg.mxu0
        %v307 = vld [vmem:[%s142] sm:$0x1]
        %v309 = vrot.slane %v302, 1
        %v311 = vadd.f32 %v302, %v309
        %v312 = vadd.f32 %v307, %v311
        %313 = vst [vmem:[%s142] sm:$0x1] %v312
        %s314 = sand.u32 %s64, 1
        %s315 = scalar_lea.sflag [#allocation4], %s314
        %s316 = sand.u32 %s64, 1
        %s317 = scalar_lea.vmem [#allocation5], %s316
        // Predicated region
        $region33: #{tpu_custom_call.1} parent=23 // pred_check
          %p318 = pneg %p74
        $region34: #{tpu_custom_call.1} parent=23 // pred_check_branch
          %320 = sbr.rel (%p318) target = $region36
        $region35: #{tpu_custom_call.1} parent=23 // pred_region
          %s322 = ssub.s32 16, 16
          %323 = vsyncadd %s315, %s322
          %s324 = smul.addr %s22, 16
          %s325 = scalar_lea.hbm %s1, %s324
          %s327 = sshll.u32 %s317, 4
          %s328 = int_to_ptr.vmem [resolvable:$true] %s327
          %330 = dma.vmem_to_hbm [thread:$0]  %s328, 16, %s325, %s315
        $region36: #{tpu_custom_call.1} parent=23 // pred_fallthru
          _
      $region24: #{tpu_custom_call.1} parent=5 // pred_fallthru
        _
      %p331 = scmp.le.s32.totalorder 2, %s13
      // Predicated region
      $region37: #{tpu_custom_call.1} parent=5 // pred_check
        %p332 = pneg %p331
      $region38: #{tpu_custom_call.1} parent=5 // pred_check_branch
        %334 = sbr.rel (%p332) target = $region40
      $region39: #{tpu_custom_call.1} parent=5 // pred_region
        %s335 = ssub.s32 %s13, 2
        // Predicated region
        $region41: #{tpu_custom_call.1} parent=39 // pred_check
          %p336 = pneg %p80
        $region42: #{tpu_custom_call.1} parent=39 // pred_check_branch
          %338 = sbr.rel (%p336) target = $region44
        $region43: #{tpu_custom_call.1} parent=39 // pred_region
          %s339 = sand.u32 %s65, 1
          %s340 = scalar_lea.sflag [#allocation4], %s339
          %s341 = sand.u32 %s65, 1
          %s342 = scalar_lea.vmem [#allocation5], %s341
          %343 = dma.done %s340, 16
        $region44: #{tpu_custom_call.1} parent=39 // pred_fallthru
          _
      $region40: #{tpu_custom_call.1} parent=5 // pred_fallthru
        _
    $region6: #{tpu_custom_call.1} parent=1 // loop_footer
      %s17 = sadd.s32 1, %s13
    $region7: #{tpu_custom_call.1} parent=1 // loop_footer_branch
      %12 = sbr.rel target = $region3
    $region8: #{tpu_custom_call.1} parent=1 // loop_exit
      _
    %344 = vsyncpa [#allocation3], 1
    %s345 = scalar_lea.sflag [#allocation3], 1
    %346 = vsyncpa %s345, 1
    %347 = vsyncpa [#allocation4], 1
    %s348 = scalar_lea.sflag [#allocation4], 1
    %349 = vsyncpa %s348, 1

</llo_original>
